<compile_context>
chip_gen: v6e
topology: v6e:2x2x1
jax: 0.10.0
libtpu: 0.0.40
codegen_flags: <defaults>
</compile_context>

<pallas_src>
import functools

import jax
import jax.numpy as jnp
from jax.experimental import pallas as pl
from jax.experimental.pallas import tpu as pltpu

# Environment constants (gym PendulumSwingUpEnv defaults) — the module has no
# learned parameters.
MAX_SPEED = 8.0
MAX_TORQUE = 2.0
DT = 0.05
G = 10.0
M = 1.0
L = 1.0

_LANE = 128      # TPU lane width
_SUBLANE = 8     # TPU sublane count (f32)


def _pendulum_kernel(state_ref, action_ref, out_ref):
    # state_ref:  (3, tr, 128) VMEM  planes = [cos(theta), sin(theta), omega]
    # action_ref: (tr, 128)    VMEM
    # out_ref:    (3, tr, 128) VMEM  planes = [cos(th'), sin(th'), omega']
    x = state_ref[0]        # cos(theta)      (tr, 128)
    y = state_ref[1]        # sin(theta)      (tr, 128)
    omega = state_ref[2]    # angular vel.    (tr, 128)

    # torch.clamp(action, -max_torque, max_torque)[..., 0]
    u = jnp.clip(action_ref[...], -MAX_TORQUE, MAX_TORQUE)

    # theta = arctan2(y, x) -> cos_th = x/r, sin_th = y/r (single rsqrt on EUP).
    # Degenerate x = y = 0: arctan2(0, 0) = 0 -> cos_th = 1, sin_th = 0.
    r2 = x * x + y * y
    ok = r2 > 0.0
    inv_r = jax.lax.rsqrt(jnp.where(ok, r2, 1.0))
    cos_th = jnp.where(ok, x * inv_r, 1.0)
    sin_th = jnp.where(ok, y * inv_r, 0.0)

    # omega_dot = -3g/(2l) * sin(theta + pi) + u / (m*l^2/3)
    #           = +3g/(2l) * sin(theta)      + 3u / (m*l^2)
    omega_dot = (3.0 * G / (2.0 * L)) * sin_th + u * (3.0 / (M * L * L))

    new_omega = omega + omega_dot * DT      # unclamped, used for new_theta
    d = new_omega * DT                      # new_theta = theta + d
    cos_d = jnp.cos(d)
    sin_d = jnp.sin(d)

    out_ref[0] = cos_th * cos_d - sin_th * sin_d   # cos(theta + d)
    out_ref[1] = sin_th * cos_d + cos_th * sin_d   # sin(theta + d)
    out_ref[2] = jnp.clip(new_omega, -MAX_SPEED, MAX_SPEED)


@functools.partial(jax.jit, static_argnames=("tile_rows",))
def pendulum_model_forward(state, action, *, tile_rows=256):
    """state: (B, 3) f32, action: (B, 1) f32 -> (new_state, zeros), both (B, 3).

    tile_rows: sublane rows per grid tile (multiple of 8). Default 256 rows
    (= 32768 batch elements/tile, ~1.7 MiB VMEM double-buffered) fits all of
    v5e/v6e/v7x; lower it only for exercising the multi-tile path.
    """
    B = state.shape[0]
    dtype = state.dtype

    # Batch -> lane-dense slab geometry: (rows, 128), rows a multiple of 8 and
    # of the tile height.
    rows = max(_SUBLANE, pl.cdiv(B, _LANE))
    rows = pl.cdiv(rows, _SUBLANE) * _SUBLANE
    tr = max(_SUBLANE, (min(tile_rows, rows) // _SUBLANE) * _SUBLANE)
    rows = pl.cdiv(rows, tr) * tr
    b_pad = rows * _LANE

    if b_pad != B:
        state_p = jnp.pad(state, ((0, b_pad - B), (0, 0)))
        action_p = jnp.pad(action[:, 0], ((0, b_pad - B),))
    else:
        state_p = state
        action_p = action[:, 0]

    # Component-major packing: batch maps onto (sublane, lane) full tiles.
    state_t = state_p.T.reshape(3, rows, _LANE)     # (3, rows, 128)
    action_t = action_p.reshape(rows, _LANE)        # (rows, 128)

    new_packed = pl.pallas_call(
        _pendulum_kernel,
        out_shape=jax.ShapeDtypeStruct((3, rows, _LANE), dtype),
        grid=(rows // tr,),
        in_specs=[
            pl.BlockSpec((3, tr, _LANE), lambda i: (0, i, 0)),
            pl.BlockSpec((tr, _LANE), lambda i: (i, 0)),
        ],
        out_specs=pl.BlockSpec((3, tr, _LANE), lambda i: (0, i, 0)),
        compiler_params=pltpu.CompilerParams(
            dimension_semantics=("parallel",)),
    )(state_t, action_t)

    new_state = new_packed.reshape(3, b_pad)[:, :B].T      # (B, 3)
    # Second output of the module: zeros. Materialized by XLA, not the kernel.
    return new_state, jnp.zeros_like(new_state)


def _reference_forward(state, action):
    """Pure-JAX reference matching the PyTorch code line-by-line."""
    action = jnp.clip(action, -MAX_TORQUE, MAX_TORQUE)[..., 0]
    theta = jnp.arctan2(state[..., 1], state[..., 0])
    inertia = M * L ** 2 / 3.0
    omega_dot = -3.0 * G / (2.0 * L) * jnp.sin(theta + jnp.pi) + action / inertia
    new_omega = state[..., 2] + omega_dot * DT
    new_theta = theta + new_omega * DT
    new_omega = jnp.clip(new_omega, -MAX_SPEED, MAX_SPEED)
    new_state = jnp.stack(
        [jnp.cos(new_theta), jnp.sin(new_theta), new_omega], axis=-1
    )
    return new_state, jnp.zeros_like(new_state)


if __name__ == "__main__":
    key = jax.random.PRNGKey(0)
    k_th, k_w, k_u, k_th2, k_w2, k_u2 = jax.random.split(key, 6)

    # --- small-batch check (single tile, heavy padding path) ---
    B = 8
    theta0 = jax.random.uniform(k_th, (B,), jnp.float32, -jnp.pi, jnp.pi)
    omega0 = jax.random.uniform(k_w, (B,), jnp.float32, -1.0, 1.0)
    state = jnp.stack([jnp.cos(theta0), jnp.sin(theta0), omega0], axis=-1)  # (B, 3)
    action = jax.random.uniform(k_u, (B, 1), jnp.float32, -3.0, 3.0)        # (B, 1)

    new_state, zeros = pendulum_model_forward(state, action)
    jax.block_until_ready((new_state, zeros))

    ref_state, _ = _reference_forward(state, action)
    assert new_state.shape == (B, 3) and zeros.shape == (B, 3)
    assert new_state.dtype == jnp.float32
    assert jnp.allclose(new_state, ref_state, atol=1e-4), "mismatch vs reference (B=8)"
    assert jnp.all(zeros == 0.0)

    # --- multi-tile grid check (tile_rows=8 -> multi-step grid, ragged batch) ---
    B2 = 2000
    theta2 = jax.random.uniform(k_th2, (B2,), jnp.float32, -jnp.pi, jnp.pi)
    omega2 = jax.random.uniform(k_w2, (B2,), jnp.float32, -1.0, 1.0)
    state2 = jnp.stack([jnp.cos(theta2), jnp.sin(theta2), omega2], axis=-1)
    action2 = jax.random.uniform(k_u2, (B2, 1), jnp.float32, -3.0, 3.0)

    new2, zeros2 = pendulum_model_forward(state2, action2, tile_rows=8)
    jax.block_until_ready((new2, zeros2))
    ref2, _ = _reference_forward(state2, action2)
    assert new2.shape == (B2, 3) and zeros2.shape == (B2, 3)
    assert jnp.allclose(new2, ref2, atol=1e-4), "mismatch vs reference (B=2000)"
    assert jnp.all(zeros2 == 0.0)

    print("KERNEL_OK")
</pallas_src>

<mosaic_0001>
module attributes {stable_mosaic.version = 11 : i64} {
  func.func @_pendulum_kernel(%arg0: i32, %arg1: memref<3x8x128xf32, #tpu.memory_space<vmem>>, %arg2: memref<8x128xf32, #tpu.memory_space<vmem>>, %arg3: memref<3x8x128xf32, #tpu.memory_space<vmem>>) attributes {dimension_semantics = [#tpu.dimension_semantics<parallel>], iteration_bounds = array<i64: 1>, scalar_prefetch = 0 : i64, scratch_operands = 0 : i64, tpu.core_type = #tpu.core_type<tc>, window_params = [{transform_indices = @transform_0, window_bounds = array<i64: 3, 8, 128>}, {transform_indices = @transform_1, window_bounds = array<i64: 8, 128>}, {transform_indices = @transform_2, window_bounds = array<i64: 3, 8, 128>}]} {
    %c0 = arith.constant 0 : index
    %c0_0 = arith.constant 0 : index
    %c0_1 = arith.constant 0 : index
    %0 = vector.load %arg1[%c0, %c0_0, %c0_1] : memref<3x8x128xf32, #tpu.memory_space<vmem>>, vector<1x8x128xf32>
    %1 = vector.shape_cast %0 : vector<1x8x128xf32> to vector<8x128xf32>
    %c1 = arith.constant 1 : index
    %c0_2 = arith.constant 0 : index
    %c0_3 = arith.constant 0 : index
    %2 = vector.load %arg1[%c1, %c0_2, %c0_3] : memref<3x8x128xf32, #tpu.memory_space<vmem>>, vector<1x8x128xf32>
    %3 = vector.shape_cast %2 : vector<1x8x128xf32> to vector<8x128xf32>
    %c2 = arith.constant 2 : index
    %c0_4 = arith.constant 0 : index
    %c0_5 = arith.constant 0 : index
    %4 = vector.load %arg1[%c2, %c0_4, %c0_5] : memref<3x8x128xf32, #tpu.memory_space<vmem>>, vector<1x8x128xf32>
    %5 = vector.shape_cast %4 : vector<1x8x128xf32> to vector<8x128xf32>
    %c0_6 = arith.constant 0 : index
    %c0_7 = arith.constant 0 : index
    %6 = vector.load %arg2[%c0_6, %c0_7] : memref<8x128xf32, #tpu.memory_space<vmem>>, vector<8x128xf32>
    %cst = arith.constant -2.000000e+00 : f32
    %cst_8 = arith.constant 2.000000e+00 : f32
    %7 = vector.broadcast %cst : f32 to vector<8x128xf32>
    %8 = arith.maximumf %7, %6 : vector<8x128xf32>
    %9 = vector.broadcast %cst_8 : f32 to vector<8x128xf32>
    %10 = arith.minimumf %9, %8 : vector<8x128xf32>
    %11 = arith.mulf %1, %1 : vector<8x128xf32>
    %12 = arith.mulf %3, %3 : vector<8x128xf32>
    %13 = arith.addf %11, %12 : vector<8x128xf32>
    %cst_9 = arith.constant 0.000000e+00 : f32
    %14 = vector.broadcast %cst_9 : f32 to vector<8x128xf32>
    %15 = arith.cmpf ogt, %13, %14 : vector<8x128xf32>
    %cst_10 = arith.constant 1.000000e+00 : f32
    %16 = vector.broadcast %cst_10 : f32 to vector<8x128xf32>
    %17 = arith.select %15, %13, %16 : vector<8x128xi1>, vector<8x128xf32>
    %18 = math.rsqrt %17 : vector<8x128xf32>
    %19 = arith.mulf %1, %18 : vector<8x128xf32>
    %cst_11 = arith.constant 1.000000e+00 : f32
    %20 = vector.broadcast %cst_11 : f32 to vector<8x128xf32>
    %21 = arith.select %15, %19, %20 : vector<8x128xi1>, vector<8x128xf32>
    %22 = arith.mulf %3, %18 : vector<8x128xf32>
    %cst_12 = arith.constant 0.000000e+00 : f32
    %23 = vector.broadcast %cst_12 : f32 to vector<8x128xf32>
    %24 = arith.select %15, %22, %23 : vector<8x128xi1>, vector<8x128xf32>
    %cst_13 = arith.constant 1.500000e+01 : f32
    %25 = vector.broadcast %cst_13 : f32 to vector<8x128xf32>
    %26 = arith.mulf %25, %24 : vector<8x128xf32>
    %cst_14 = arith.constant 3.000000e+00 : f32
    %27 = vector.broadcast %cst_14 : f32 to vector<8x128xf32>
    %28 = arith.mulf %10, %27 : vector<8x128xf32>
    %29 = arith.addf %26, %28 : vector<8x128xf32>
    %cst_15 = arith.constant 5.000000e-02 : f32
    %30 = vector.broadcast %cst_15 : f32 to vector<8x128xf32>
    %31 = arith.mulf %29, %30 : vector<8x128xf32>
    %32 = arith.addf %5, %31 : vector<8x128xf32>
    %cst_16 = arith.constant 5.000000e-02 : f32
    %33 = vector.broadcast %cst_16 : f32 to vector<8x128xf32>
    %34 = arith.mulf %32, %33 : vector<8x128xf32>
    %35 = math.cos %34 : vector<8x128xf32>
    %36 = math.sin %34 : vector<8x128xf32>
    %37 = arith.mulf %21, %35 : vector<8x128xf32>
    %38 = arith.mulf %24, %36 : vector<8x128xf32>
    %39 = arith.subf %37, %38 : vector<8x128xf32>
    %c0_17 = arith.constant 0 : index
    %c0_18 = arith.constant 0 : index
    %c0_19 = arith.constant 0 : index
    %40 = vector.load %arg3[%c0_17, %c0_18, %c0_19] : memref<3x8x128xf32, #tpu.memory_space<vmem>>, vector<1x8x128xf32>
    %41 = vector.shape_cast %40 : vector<1x8x128xf32> to vector<8x128xf32>
    %42 = vector.shape_cast %39 : vector<8x128xf32> to vector<1x8x128xf32>
    tpu.vector_store %arg3[%c0_17, %c0_18, %c0_19], %42 {strides = array<i32>} : memref<3x8x128xf32, #tpu.memory_space<vmem>>, vector<1x8x128xf32>,
    %43 = arith.mulf %24, %35 : vector<8x128xf32>
    %44 = arith.mulf %21, %36 : vector<8x128xf32>
    %45 = arith.addf %43, %44 : vector<8x128xf32>
    %c1_20 = arith.constant 1 : index
    %c0_21 = arith.constant 0 : index
    %c0_22 = arith.constant 0 : index
    %46 = vector.load %arg3[%c1_20, %c0_21, %c0_22] : memref<3x8x128xf32, #tpu.memory_space<vmem>>, vector<1x8x128xf32>
    %47 = vector.shape_cast %46 : vector<1x8x128xf32> to vector<8x128xf32>
    %48 = vector.shape_cast %45 : vector<8x128xf32> to vector<1x8x128xf32>
    tpu.vector_store %arg3[%c1_20, %c0_21, %c0_22], %48 {strides = array<i32>} : memref<3x8x128xf32, #tpu.memory_space<vmem>>, vector<1x8x128xf32>,
    %cst_23 = arith.constant -8.000000e+00 : f32
    %cst_24 = arith.constant 8.000000e+00 : f32
    %49 = vector.broadcast %cst_23 : f32 to vector<8x128xf32>
    %50 = arith.maximumf %49, %32 : vector<8x128xf32>
    %51 = vector.broadcast %cst_24 : f32 to vector<8x128xf32>
    %52 = arith.minimumf %51, %50 : vector<8x128xf32>
    %c2_25 = arith.constant 2 : index
    %c0_26 = arith.constant 0 : index
    %c0_27 = arith.constant 0 : index
    %53 = vector.load %arg3[%c2_25, %c0_26, %c0_27] : memref<3x8x128xf32, #tpu.memory_space<vmem>>, vector<1x8x128xf32>
    %54 = vector.shape_cast %53 : vector<1x8x128xf32> to vector<8x128xf32>
    %55 = vector.shape_cast %52 : vector<8x128xf32> to vector<1x8x128xf32>
    tpu.vector_store %arg3[%c2_25, %c0_26, %c0_27], %55 {strides = array<i32>} : memref<3x8x128xf32, #tpu.memory_space<vmem>>, vector<1x8x128xf32>,
    return
  }
  func.func @transform_0(%arg0: i32) -> (i32, i32, i32) {
    %c0_i32 = arith.constant 0 : i32
    %c0_i32_0 = arith.constant 0 : i32
    %c0_i32_1 = arith.constant 0 : i32
    return %c0_i32, %arg0, %c0_i32_0 : i32, i32, i32
  }
  func.func @transform_1(%arg0: i32) -> (i32, i32) {
    %c0_i32 = arith.constant 0 : i32
    %c0_i32_0 = arith.constant 0 : i32
    return %arg0, %c0_i32 : i32, i32
  }
  func.func @transform_2(%arg0: i32) -> (i32, i32, i32) {
    %c0_i32 = arith.constant 0 : i32
    %c0_i32_0 = arith.constant 0 : i32
    %c0_i32_1 = arith.constant 0 : i32
    return %c0_i32, %arg0, %c0_i32_0 : i32, i32, i32
  }
}

</mosaic_0001>

<llo_original>
// kernel: pendulum_model_forward.1
$region0: #{pendulum_model_forward.1}
  #allocation0 [shape = 'u32[]', space=smem, size = 0x4, offset = 0x4, fixed_abs, tag = 'smem constant byte address 0x4 - core index']
  #allocation1 [shape = 'u32[144,128]{1,0:T(1,128)}', space=vmem, size = 0x12000, scoped, tag = 'internal scratch']
  %s0 = inlined_call_operand.vmem [shape: f32[3,8,128], index: 0, kind: input, shape index: {}]
  %s1 = inlined_call_operand.vmem [shape: f32[8,128], index: 1, kind: input, shape index: {}]
  %s2 = inlined_call_operand.vmem [shape: f32[3,8,128], index: 2, kind: output, shape index: {}]
  %s3 = sld [smem:[#allocation0]]
  $region18: #{pendulum_model_forward.1} parent=0
    _
  %s5 = ssub.s32 1, %s3
  %s6 = scalar_select 0, %s5, %s3
  // Predicated region
  $region2: #{pendulum_model_forward.1} parent=0 // pred_check
    _
  $region3: #{pendulum_model_forward.1} parent=0 // pred_check_branch
    %8 = sbr.rel (0) target = $region5
  $region4: #{pendulum_model_forward.1} parent=0 // pred_region
    _
  $region5: #{pendulum_model_forward.1} parent=0 // pred_fallthru
    _
  // Predicated region
  $region6: #{pendulum_model_forward.1} parent=0 // pred_check
    _
  $region7: #{pendulum_model_forward.1} parent=0 // pred_check_branch
    %10 = sbr.rel (0) target = $region9
  $region8: #{pendulum_model_forward.1} parent=0 // pred_region
    _
  $region9: #{pendulum_model_forward.1} parent=0 // pred_fallthru
    _
  %v11 = vld [vmem:[%s0] sm:$0xff]
  %s12 = scalar_lea.vmem %s0, 8
  %v13 = vld [vmem:[%s12] sm:$0xff]
  %s14 = scalar_lea.vmem %s0, 16
  %v15 = vld [vmem:[%s14] sm:$0xff]
  %v16 = vld [vmem:[%s1] sm:$0xff]
  %v17 = vmax.f32 %v16, -2.0
  %v18 = vmin.f32 %v17, 2.0
  %v19 = vmul.f32 %v11, %v11
  %v20 = vmul.f32 %v13, %v13
  %v21 = vadd.f32 %v19, %v20
  %vm22 = vcmp.gt.f32.partialorder %v21, 0.0
  %v23 = vsel %vm22, %v21, 1.0
  %v24 = vrsqrt.pop %v23
  %v25 = vmul.f32 %v11, %v24
  %v26 = vsel %vm22, %v25, 1.0
  %v27 = vmul.f32 %v13, %v24
  %v28 = vsel %vm22, %v27, 0.0
  %v29 = vmul.f32 %v28, 15.0
  %v30 = vmul.f32 %v18, 3.0
  %v31 = vadd.f32 %v29, %v30
  %v32 = vmul.f32 %v31, 0.05
  %v33 = vadd.f32 %v15, %v32
  %v34 = vmul.f32 %v33, 0.05
  %v35 = vand.u32 2147483647, %v34
  %vm36 = vcmp.le.f32.partialorder %v35, 0.7853982
  %vm37 = vcmp.lt.s32.totalorder %v34, 0
  %v38 = vand.u32 %v34, 2139095040
  %v39 = vshrl.u32 %v38, 23
  %v40 = vsub.s32 %v39, 127
  %v41 = vand.u32 2147483647, %v34
  %v42 = vand.u32 %v41, 8388607
  %v43 = vor.u32 %v42, 8388608
  %v44 = vsub.s32 0, %v43
  %v45 = vadd.s32 %v40, 1
  %vm46 = vcmp.gt.s32.totalorder %v45, 0
  %v47 = vsel %vm46, %v45, 0
  %v48 = vshrl.u32 %v47, 5
  %v49 = vand.u32 %v47, 31
  %v50 = vsub.s32 32, %v49
  %v51 = vshrl.u32 683565275, %v50
  %v52 = vshll.u32 683565275, %v49
  %v53 = vshrl.u32 2475754826, %v50
  %v54 = vor.u32 %v52, %v53
  %v55 = vshll.u32 2475754826, %v49
  %v56 = vshrl.u32 2131351028, %v50
  %v57 = vor.u32 %v55, %v56
  %v58 = vshll.u32 2131351028, %v49
  %v59 = vshrl.u32 2102212464, %v50
  %v60 = vor.u32 %v58, %v59
  %v61 = vshll.u32 2102212464, %v49
  %v62 = vshrl.u32 920167782, %v50
  %v63 = vor.u32 %v61, %v62
  %v64 = vshll.u32 920167782, %v49
  %v65 = vshrl.u32 1326507024, %v50
  %v66 = vor.u32 %v64, %v65
  %vm67 = vcmp.lt.s32.totalorder %v48, 1
  %vm68 = vcmp.lt.s32.totalorder %v48, 2
  %vm69 = vcmp.lt.s32.totalorder %v48, 3
  %vm70 = vcmp.lt.s32.totalorder %v48, 4
  %v71 = vsel %vm67, %v51, %v54
  %v72 = vsel %vm70, %v60, 2102212464
  %v73 = vsel %vm69, %v57, %v72
  %v74 = vsel %vm68, %v71, %v73
  %v75 = vsel %vm67, %v54, %v57
  %v76 = vsel %vm70, %v63, 920167782
  %v77 = vsel %vm69, %v60, %v76
  %v78 = vsel %vm68, %v75, %v77
  %v79 = vsel %vm67, %v57, %v60
  %v80 = vsel %vm70, %v66, 1326507024
  %v81 = vsel %vm69, %v63, %v80
  %v82 = vsel %vm68, %v79, %v81
  %v83 = vshll.u32 %v43, 8
  %v84 = vmul.u32.u64.compose %v83, %v82
  %v85 = vextract.low.u32 %v84
  %v86 = vextract.high.u32 %v84
  %v87 = vmul.u32.u64.compose %v83, %v78
  %v88 = vextract.low.u32 %v87
  %v89 = vextract.high.u32 %v87
  %v90 = vmul.u32 %v83, %v74
  %v91 = vadd.s32 %v86, %v88
  %vm92 = vc.u32 %v86, %v88
  %v93 = vadd.s32 %v89, 1
  %v94 = vsel %vm92, %v93, %v89
  %v95 = vadd.s32 %v90, %v94
  %v96 = vadd.s32 %v95, 536870912
  %v97 = vshrl.u32 %v96, 30
  %v98 = vshll.u32 %v97, 30
  %v99 = vsub.s32 %v95, %v98
  %vm100 = vcmp.lt.s32.totalorder %v99, 0
  %v101 = vsub.s32 0, %v99
  %v102 = vsel %vm100, %v101, %v99
  %v103 = vclz %v102
  %v104 = vsub.s32 %v103, 2
  %vm105 = vcmp.gt.s32.totalorder 0, %v104
  %v106 = vsel %vm105, 0, %v104
  %v107 = vsub.s32 32, %v106
  %v108 = vshll.u32 %v99, %v106
  %v109 = vshrl.u32 %v91, %v107
  %v110 = vor.u32 %v108, %v109
  %v111 = vsub.s32 4294967266, %v106
  %v112 = vadd.s32 %v111, 127
  %v113 = vshll.u32 %v112, 23
  %v114 = vor.u32 4788187, %v113
  %v115 = vand.u32 2147483647, %v114
  %v117 = vcvt.s32.f32 %v110
  %v118 = vmul.f32 %v117, %v115
  %v119 = vxor.u32 %v118, 2147483648
  %v120 = vsel %vm37, %v119, %v118
  %v121 = vsub.s32 4, %v97
  %v122 = vsel %vm37, %v121, %v97
  %v123 = vsel %vm36, %v34, %v120
  %v124 = vsel %vm36, 0, %v122
  %v125 = vcosq.f32.pop %v123
  %v126 = vsinq.f32.pop %v123
  %vm127 = vweird.f32 %v34
  %v128 = vand.u32 %v124, 3
  %vm129 = vcmp.lt.s32.totalorder %v128, 2
  %vm130 = vcmp.eq.s32.totalorder %v128, 0
  %v131 = vxor.u32 %v126, 2147483648
  %v132 = vsel %vm130, %v125, %v131
  %vm133 = vcmp.eq.s32.totalorder %v128, 2
  %v134 = vxor.u32 %v125, 2147483648
  %v135 = vsel %vm133, %v134, %v126
  %v136 = vsel %vm129, %v132, %v135
  %v137 = vsel %vm127, nan, %v136
  %v138 = vand.u32 2147483647, %v34
  %vm139 = vcmp.le.f32.partialorder %v138, 0.7853982
  %vm140 = vcmp.lt.s32.totalorder %v34, 0
  %v141 = vand.u32 %v34, 2139095040
  %v142 = vshrl.u32 %v141, 23
  %v143 = vsub.s32 %v142, 127
  %v144 = vand.u32 2147483647, %v34
  %v145 = vand.u32 %v144, 8388607
  %v146 = vor.u32 %v145, 8388608
  %v147 = vsub.s32 0, %v146
  %v148 = vadd.s32 %v143, 1
  %vm149 = vcmp.gt.s32.totalorder %v148, 0
  %v150 = vsel %vm149, %v148, 0
  %v151 = vshrl.u32 %v150, 5
  %v152 = vand.u32 %v150, 31
  %v153 = vsub.s32 32, %v152
  %v154 = vshrl.u32 683565275, %v153
  %v155 = vshll.u32 683565275, %v152
  %v156 = vshrl.u32 2475754826, %v153
  %v157 = vor.u32 %v155, %v156
  %v158 = vshll.u32 2475754826, %v152
  %v159 = vshrl.u32 2131351028, %v153
  %v160 = vor.u32 %v158, %v159
  %v161 = vshll.u32 2131351028, %v152
  %v162 = vshrl.u32 2102212464, %v153
  %v163 = vor.u32 %v161, %v162
  %v164 = vshll.u32 2102212464, %v152
  %v165 = vshrl.u32 920167782, %v153
  %v166 = vor.u32 %v164, %v165
  %v167 = vshll.u32 920167782, %v152
  %v168 = vshrl.u32 1326507024, %v153
  %v169 = vor.u32 %v167, %v168
  %vm170 = vcmp.lt.s32.totalorder %v151, 1
  %vm171 = vcmp.lt.s32.totalorder %v151, 2
  %vm172 = vcmp.lt.s32.totalorder %v151, 3
  %vm173 = vcmp.lt.s32.totalorder %v151, 4
  %v174 = vsel %vm170, %v154, %v157
  %v175 = vsel %vm173, %v163, 2102212464
  %v176 = vsel %vm172, %v160, %v175
  %v177 = vsel %vm171, %v174, %v176
  %v178 = vsel %vm170, %v157, %v160
  %v179 = vsel %vm173, %v166, 920167782
  %v180 = vsel %vm172, %v163, %v179
  %v181 = vsel %vm171, %v178, %v180
  %v182 = vsel %vm170, %v160, %v163
  %v183 = vsel %vm173, %v169, 1326507024
  %v184 = vsel %vm172, %v166, %v183
  %v185 = vsel %vm171, %v182, %v184
  %v186 = vshll.u32 %v146, 8
  %v187 = vmul.u32.u64.compose %v186, %v185
  %v188 = vextract.low.u32 %v187
  %v189 = vextract.high.u32 %v187
  %v190 = vmul.u32.u64.compose %v186, %v181
  %v191 = vextract.low.u32 %v190
  %v192 = vextract.high.u32 %v190
  %v193 = vmul.u32 %v186, %v177
  %v194 = vadd.s32 %v189, %v191
  %vm195 = vc.u32 %v189, %v191
  %v196 = vadd.s32 %v192, 1
  %v197 = vsel %vm195, %v196, %v192
  %v198 = vadd.s32 %v193, %v197
  %v199 = vadd.s32 %v198, 536870912
  %v200 = vshrl.u32 %v199, 30
  %v201 = vshll.u32 %v200, 30
  %v202 = vsub.s32 %v198, %v201
  %vm203 = vcmp.lt.s32.totalorder %v202, 0
  %v204 = vsub.s32 0, %v202
  %v205 = vsel %vm203, %v204, %v202
  %v206 = vclz %v205
  %v207 = vsub.s32 %v206, 2
  %vm208 = vcmp.gt.s32.totalorder 0, %v207
  %v209 = vsel %vm208, 0, %v207
  %v210 = vsub.s32 32, %v209
  %v211 = vshll.u32 %v202, %v209
  %v212 = vshrl.u32 %v194, %v210
  %v213 = vor.u32 %v211, %v212
  %v214 = vsub.s32 4294967266, %v209
  %v215 = vadd.s32 %v214, 127
  %v216 = vshll.u32 %v215, 23
  %v217 = vor.u32 4788187, %v216
  %v218 = vand.u32 2147483647, %v217
  %v220 = vcvt.s32.f32 %v213
  %v221 = vmul.f32 %v220, %v218
  %v222 = vxor.u32 %v221, 2147483648
  %v223 = vsel %vm140, %v222, %v221
  %v224 = vsub.s32 4, %v200
  %v225 = vsel %vm140, %v224, %v200
  %v226 = vsel %vm139, %v34, %v223
  %v227 = vsel %vm139, 0, %v225
  %v228 = vcosq.f32.pop %v226
  %v229 = vsinq.f32.pop %v226
  %vm230 = vweird.f32 %v34
  %v231 = vadd.s32 %v227, 3
  %v232 = vand.u32 %v231, 3
  %vm233 = vcmp.lt.s32.totalorder %v232, 2
  %vm234 = vcmp.eq.s32.totalorder %v232, 0
  %v235 = vxor.u32 %v229, 2147483648
  %v236 = vsel %vm234, %v228, %v235
  %vm237 = vcmp.eq.s32.totalorder %v232, 2
  %v238 = vxor.u32 %v228, 2147483648
  %v239 = vsel %vm237, %v238, %v229
  %v240 = vsel %vm233, %v236, %v239
  %v241 = vsel %vm230, nan, %v240
  %v242 = vmul.f32 %v26, %v137
  %v243 = vmul.f32 %v28, %v241
  %v244 = vsub.f32 %v242, %v243
  %245 = vst [vmem:[%s2] sm:$0xff] %v244
  %v246 = vmul.f32 %v28, %v137
  %v247 = vmul.f32 %v26, %v241
  %v248 = vadd.f32 %v246, %v247
  %s249 = scalar_lea.vmem %s2, 8
  %250 = vst [vmem:[%s249] sm:$0xff] %v248
  %v251 = vmax.f32 %v33, -8.0
  %v252 = vmin.f32 %v251, 8.0
  %s253 = scalar_lea.vmem %s2, 16
  %254 = vst [vmem:[%s253] sm:$0xff] %v252
  // Predicated region
  $region10: #{pendulum_model_forward.1} parent=0 // pred_check
    _
  $region11: #{pendulum_model_forward.1} parent=0 // pred_check_branch
    %256 = sbr.rel (0) target = $region13
  $region12: #{pendulum_model_forward.1} parent=0 // pred_region
    _
  $region13: #{pendulum_model_forward.1} parent=0 // pred_fallthru
    _
  // Predicated region
  $region14: #{pendulum_model_forward.1} parent=0 // pred_check
    _
  $region15: #{pendulum_model_forward.1} parent=0 // pred_check_branch
    %258 = sbr.rel (0) target = $region17
  $region16: #{pendulum_model_forward.1} parent=0 // pred_region
    _
  $region17: #{pendulum_model_forward.1} parent=0 // pred_fallthru
    _

</llo_original>
